<compile_context>
chip_gen: v6e
topology: v6e:2x2x1
jax: 0.10.0
libtpu: 0.0.40
codegen_flags: <defaults>
</compile_context>

<pallas_src>
import jax
import jax.numpy as jnp
from jax.experimental import pallas as pl
from jax.experimental.pallas import tpu as pltpu


def value_net_kernel(x_ref, w1_ref, b1_ref, w2_ref, b2_ref, o_ref):
    # x_ref : (S, bm)  -- batch on lanes
    # w1_ref: (H, S)   -- PyTorch fc1.weight layout, resident
    # b1_ref: (H, 1)   -- resident
    # w2_ref: (H, 1)   -- fc2.weight.T, resident
    # b2_ref: (1,)     -- SMEM scalar
    # o_ref : (1, bm)  -- lane-dense output row
    S = x_ref.shape[0]
    x = x_ref[...]
    w1 = w1_ref[...]

    # fc1: h[j, b] = sum_k w1[j, k] * x[k, b] + b1[j]
    # K = S = 4 -> unrolled broadcast-FMAs on the VPU (MXU would be ~97% padding).
    h = b1_ref[...] + w1[:, 0:1] * x[0:1, :]
    for k in range(1, S):
        h = h + w1[:, k:k+1] * x[k:k+1, :]

    # ReLU
    h = jnp.maximum(h, 0.0)

    # fc2: out[b] = sum_j w2[j] * h[j, b] + b2  -> VPU multiply + sublane reduce.
    out = jnp.sum(h * w2_ref[...], axis=0, keepdims=True)      # (1, bm)
    o_ref[...] = (out + b2_ref[0]).astype(o_ref.dtype)


def value_net_forward(x, w1, b1, w2, b2, *, bm=1024):
    """Fused ValueNet forward.

    x : (B, state_dim) f32
    w1: (hidden, state_dim) f32   (PyTorch fc1.weight layout)
    b1: (hidden,) f32
    w2: (1, hidden) f32           (PyTorch fc2.weight layout)
    b2: (1,) f32
    returns (B, 1) f32 == relu(x @ w1.T + b1) @ w2.T + b2
    """
    B, S = x.shape
    H = w1.shape[0]

    # Batch tile: multiple of 128 lanes, no bigger than needed; sweep 512-2048
    # for large training batches (fewer, fatter grid steps win on v5e/v6e).
    bm = max(128, min(bm, pl.cdiv(B, 128) * 128))
    Bp = pl.cdiv(B, bm) * bm
    num_tiles = Bp // bm

    # Batch-on-lanes presentation of the input (layout plumbing in the wrapper).
    xT = x.T                                      # (S, B)
    if Bp != B:
        xT = jnp.pad(xT, ((0, 0), (0, Bp - B)))   # pad rows are sliced off below

    flops = 2 * B * S * H + 3 * B * H             # fc1 FMAs + relu + fc2 mul/add
    bytes_accessed = 4 * (B * S + B + H * S + 2 * H + 1)

    out = pl.pallas_call(
        value_net_kernel,
        out_shape=jax.ShapeDtypeStruct((1, Bp), jnp.float32),
        grid=(num_tiles,),
        in_specs=[
            pl.BlockSpec((S, bm), lambda i: (0, i)),              # x tile (pipelined)
            pl.BlockSpec((H, S), lambda i: (0, 0)),               # w1 resident
            pl.BlockSpec((H, 1), lambda i: (0, 0)),               # b1 resident
            pl.BlockSpec((H, 1), lambda i: (0, 0)),               # w2 resident
            pl.BlockSpec(memory_space=pltpu.MemorySpace.SMEM),    # b2 scalar
        ],
        out_specs=pl.BlockSpec((1, bm), lambda i: (0, i)),        # lane-dense stores
        compiler_params=pltpu.CompilerParams(
            dimension_semantics=("parallel",),                    # use both v7x TCs
        ),
        cost_estimate=pl.CostEstimate(
            flops=flops, transcendentals=0, bytes_accessed=bytes_accessed),
    )(xT, w1, b1.reshape(H, 1), w2.reshape(H, 1), b2)

    return out[0, :B].reshape(B, 1)


def init_params(key, state_dim, hidden_dim):
    """Deterministic init mirroring torch.nn.Linear defaults
    (U[-1/sqrt(fan_in), +1/sqrt(fan_in)]), stored in PyTorch layouts."""
    k1, k2, k3, k4 = jax.random.split(key, 4)
    bound1 = 1.0 / jnp.sqrt(jnp.float32(state_dim))
    bound2 = 1.0 / jnp.sqrt(jnp.float32(hidden_dim))
    w1 = jax.random.uniform(k1, (hidden_dim, state_dim), jnp.float32, -bound1, bound1)
    b1 = jax.random.uniform(k2, (hidden_dim,), jnp.float32, -bound1, bound1)
    w2 = jax.random.uniform(k3, (1, hidden_dim), jnp.float32, -bound2, bound2)
    b2 = jax.random.uniform(k4, (1,), jnp.float32, -bound2, bound2)
    return w1, b1, w2, b2


if __name__ == "__main__":
    # CartPole-v1 observation space is 4-dimensional.
    state_dim = 4
    hidden_dim = 128
    batch = 8

    key = jax.random.PRNGKey(0)
    k_x, k_p = jax.random.split(key)
    x = jax.random.normal(k_x, (batch, state_dim), dtype=jnp.float32)
    w1, b1, w2, b2 = init_params(k_p, state_dim, hidden_dim)

    out = value_net_forward(x, w1, b1, w2, b2)
    out = jax.block_until_ready(out)

    # Pure-JAX reference (same math as the PyTorch forward).
    ref = jnp.maximum(x @ w1.T + b1[None, :], 0.0) @ w2.T + b2[None, :]
    assert out.shape == (batch, 1)
    assert jnp.allclose(out, ref, atol=1e-5, rtol=1e-5)

    print("KERNEL_OK")
</pallas_src>

<mosaic_0001>
module attributes {stable_mosaic.version = 11 : i64} {
  func.func @value_net_kernel(%arg0: i32, %arg1: memref<4x128xf32, #tpu.memory_space<vmem>>, %arg2: memref<128x4xf32, #tpu.memory_space<vmem>>, %arg3: memref<128x1xf32, #tpu.memory_space<vmem>>, %arg4: memref<128x1xf32, #tpu.memory_space<vmem>>, %arg5: memref<1xf32, #tpu.memory_space<smem>>, %arg6: memref<1x128xf32, #tpu.memory_space<vmem>>) attributes {dimension_semantics = [#tpu.dimension_semantics<parallel>], iteration_bounds = array<i64: 1>, scalar_prefetch = 0 : i64, scratch_operands = 0 : i64, tpu.core_type = #tpu.core_type<tc>, window_params = [{transform_indices = @transform_0, window_bounds = array<i64: 4, 128>}, {pipeline_mode = #tpu.pipeline_mode<synchronous>, transform_indices = @transform_1, window_bounds = array<i64: 128, 4>}, {pipeline_mode = #tpu.pipeline_mode<synchronous>, transform_indices = @transform_2, window_bounds = array<i64: 128, 1>}, {pipeline_mode = #tpu.pipeline_mode<synchronous>, transform_indices = @transform_3, window_bounds = array<i64: 128, 1>}, {transform_indices = @transform_4, window_bounds = array<i64: 1>}, {transform_indices = @transform_5, window_bounds = array<i64: 1, 128>}]} {
    %c0 = arith.constant 0 : index
    %c0_0 = arith.constant 0 : index
    %0 = vector.load %arg1[%c0, %c0_0] : memref<4x128xf32, #tpu.memory_space<vmem>>, vector<4x128xf32>
    %c0_1 = arith.constant 0 : index
    %c0_2 = arith.constant 0 : index
    %1 = vector.load %arg2[%c0_1, %c0_2] : memref<128x4xf32, #tpu.memory_space<vmem>>, vector<128x4xf32>
    %c0_3 = arith.constant 0 : index
    %c0_4 = arith.constant 0 : index
    %2 = vector.load %arg3[%c0_3, %c0_4] : memref<128x1xf32, #tpu.memory_space<vmem>>, vector<128x1xf32>
    %3 = vector.extract_strided_slice %1 {offsets = [0, 0], sizes = [128, 1], strides = [1, 1]} : vector<128x4xf32> to vector<128x1xf32>
    %4 = vector.extract_strided_slice %0 {offsets = [0, 0], sizes = [1, 128], strides = [1, 1]} : vector<4x128xf32> to vector<1x128xf32>
    %5 = vector.broadcast %3 : vector<128x1xf32> to vector<128x128xf32>
    %6 = vector.broadcast %4 : vector<1x128xf32> to vector<128x128xf32>
    %7 = arith.mulf %5, %6 : vector<128x128xf32>
    %8 = vector.broadcast %2 : vector<128x1xf32> to vector<128x128xf32>
    %9 = arith.addf %8, %7 : vector<128x128xf32>
    %10 = vector.extract_strided_slice %1 {offsets = [0, 1], sizes = [128, 1], strides = [1, 1]} : vector<128x4xf32> to vector<128x1xf32>
    %11 = vector.extract_strided_slice %0 {offsets = [1, 0], sizes = [1, 128], strides = [1, 1]} : vector<4x128xf32> to vector<1x128xf32>
    %12 = vector.broadcast %10 : vector<128x1xf32> to vector<128x128xf32>
    %13 = vector.broadcast %11 : vector<1x128xf32> to vector<128x128xf32>
    %14 = arith.mulf %12, %13 : vector<128x128xf32>
    %15 = arith.addf %9, %14 : vector<128x128xf32>
    %16 = vector.extract_strided_slice %1 {offsets = [0, 2], sizes = [128, 1], strides = [1, 1]} : vector<128x4xf32> to vector<128x1xf32>
    %17 = vector.extract_strided_slice %0 {offsets = [2, 0], sizes = [1, 128], strides = [1, 1]} : vector<4x128xf32> to vector<1x128xf32>
    %18 = vector.broadcast %16 : vector<128x1xf32> to vector<128x128xf32>
    %19 = vector.broadcast %17 : vector<1x128xf32> to vector<128x128xf32>
    %20 = arith.mulf %18, %19 : vector<128x128xf32>
    %21 = arith.addf %15, %20 : vector<128x128xf32>
    %22 = vector.extract_strided_slice %1 {offsets = [0, 3], sizes = [128, 1], strides = [1, 1]} : vector<128x4xf32> to vector<128x1xf32>
    %23 = vector.extract_strided_slice %0 {offsets = [3, 0], sizes = [1, 128], strides = [1, 1]} : vector<4x128xf32> to vector<1x128xf32>
    %24 = vector.broadcast %22 : vector<128x1xf32> to vector<128x128xf32>
    %25 = vector.broadcast %23 : vector<1x128xf32> to vector<128x128xf32>
    %26 = arith.mulf %24, %25 : vector<128x128xf32>
    %27 = arith.addf %21, %26 : vector<128x128xf32>
    %cst = arith.constant 0.000000e+00 : f32
    %28 = vector.broadcast %cst : f32 to vector<128x128xf32>
    %29 = arith.maximumf %27, %28 : vector<128x128xf32>
    %c0_5 = arith.constant 0 : index
    %c0_6 = arith.constant 0 : index
    %30 = vector.load %arg4[%c0_5, %c0_6] : memref<128x1xf32, #tpu.memory_space<vmem>>, vector<128x1xf32>
    %31 = vector.broadcast %30 : vector<128x1xf32> to vector<128x128xf32>
    %32 = arith.mulf %29, %31 : vector<128x128xf32>
    %cst_7 = arith.constant dense<0.000000e+00> : vector<128xf32>
    %33 = vector.multi_reduction <add>, %32, %cst_7 [0] : vector<128x128xf32> to vector<128xf32>
    %34 = vector.shape_cast %33 : vector<128xf32> to vector<1x128xf32>
    %c0_8 = arith.constant 0 : index
    %35 = memref.load %arg5[%c0_8] : memref<1xf32, #tpu.memory_space<smem>>
    %36 = vector.broadcast %35 : f32 to vector<1x128xf32>
    %37 = arith.addf %34, %36 : vector<1x128xf32>
    %c0_9 = arith.constant 0 : index
    %c0_10 = arith.constant 0 : index
    %38 = vector.load %arg6[%c0_9, %c0_10] : memref<1x128xf32, #tpu.memory_space<vmem>>, vector<1x128xf32>
    tpu.vector_store %arg6[%c0_9, %c0_10], %37 {strides = array<i32>} : memref<1x128xf32, #tpu.memory_space<vmem>>, vector<1x128xf32>,
    return
  }
  func.func @transform_0(%arg0: i32) -> (i32, i32) {
    %c0_i32 = arith.constant 0 : i32
    %c0_i32_0 = arith.constant 0 : i32
    return %c0_i32, %arg0 : i32, i32
  }
  func.func @transform_1(%arg0: i32) -> (i32, i32) {
    %c0_i32 = arith.constant 0 : i32
    %c0_i32_0 = arith.constant 0 : i32
    %c0_i32_1 = arith.constant 0 : i32
    return %c0_i32, %c0_i32_0 : i32, i32
  }
  func.func @transform_2(%arg0: i32) -> (i32, i32) {
    %c0_i32 = arith.constant 0 : i32
    %c0_i32_0 = arith.constant 0 : i32
    %c0_i32_1 = arith.constant 0 : i32
    return %c0_i32, %c0_i32_0 : i32, i32
  }
  func.func @transform_3(%arg0: i32) -> (i32, i32) {
    %c0_i32 = arith.constant 0 : i32
    %c0_i32_0 = arith.constant 0 : i32
    %c0_i32_1 = arith.constant 0 : i32
    return %c0_i32, %c0_i32_0 : i32, i32
  }
  func.func @transform_4(%arg0: i32) -> i32 {
    %c0_i32 = arith.constant 0 : i32
    %c0_i32_0 = arith.constant 0 : i32
    return %c0_i32 : i32
  }
  func.func @transform_5(%arg0: i32) -> (i32, i32) {
    %c0_i32 = arith.constant 0 : i32
    %c0_i32_0 = arith.constant 0 : i32
    return %c0_i32, %arg0 : i32, i32
  }
}

</mosaic_0001>

<llo_original>
// kernel: tpu_custom_call.1
$region0: #{tpu_custom_call.1}
  #allocation0 [shape = 'u32[]', space=smem, size = 0x4, offset = 0x4, fixed_abs, tag = 'smem constant byte address 0x4 - core index']
  #allocation1 [shape = 'u32[144,128]{1,0:T(1,128)}', space=vmem, size = 0x12000, scoped, tag = 'internal scratch']
  #allocation2 [shape = 'f32[1]{0:T(128)S(6)}', space=smem, size = 0x200, scoped, tag = 'scoped memory for tpu_custom_call.1']
  %s0 = inlined_call_operand.vmem [shape: f32[4,128], index: 0, kind: input, shape index: {}]
  %s1 = inlined_call_operand.vmem [shape: f32[128,4], index: 1, kind: input, shape index: {}]
  %s2 = inlined_call_operand.vmem [shape: f32[128,1], index: 2, kind: input, shape index: {}]
  %s3 = inlined_call_operand.vmem [shape: f32[128,1], index: 3, kind: input, shape index: {}]
  %s4 = inlined_call_operand.<no memory space> [shape: f32[1], index: 4, kind: input, shape index: {}]
  %s5 = inlined_call_operand.hbm [shape: f32[1,128], index: 5, kind: output, shape index: {}]
  %s6 = sld [smem:[#allocation0]]
  $region30: #{tpu_custom_call.1} parent=0
    _
  %s8 = ssub.s32 1, %s6
  %s9 = scalar_select 0, %s8, %s6
  %10 = sst [smem:[#allocation2]] %s4
  $region1: #{tpu_custom_call.1} parent=0
    #allocation3 [shape = 'u8[512]{0}', space=vmem, size = 0x400, scoped, tag = 'output window, operand 0, single buffered']
    #allocation4 [shape = 's32[1]{0}', space=sflag, size = 0x4, scoped, tag = 'scoped memory for tpu_custom_call.1']
    %11 = vsyncpa [#allocation4], 0
    // Predicated region
    $region2: #{tpu_custom_call.1} parent=1 // pred_check
      _
    $region3: #{tpu_custom_call.1} parent=1 // pred_check_branch
      %13 = sbr.rel (0) target = $region5
    $region4: #{tpu_custom_call.1} parent=1 // pred_region
      _
    $region5: #{tpu_custom_call.1} parent=1 // pred_fallthru
      _
    // Predicated region
    $region6: #{tpu_custom_call.1} parent=1 // pred_check
      _
    $region7: #{tpu_custom_call.1} parent=1 // pred_check_branch
      %15 = sbr.rel (0) target = $region9
    $region8: #{tpu_custom_call.1} parent=1 // pred_region
      _
    $region9: #{tpu_custom_call.1} parent=1 // pred_fallthru
      _
    // Predicated region
    $region10: #{tpu_custom_call.1} parent=1 // pred_check
      _
    $region11: #{tpu_custom_call.1} parent=1 // pred_check_branch
      %17 = sbr.rel (0) target = $region13
    $region12: #{tpu_custom_call.1} parent=1 // pred_region
      _
    $region13: #{tpu_custom_call.1} parent=1 // pred_fallthru
      _
    // Predicated region
    $region14: #{tpu_custom_call.1} parent=1 // pred_check
      _
    $region15: #{tpu_custom_call.1} parent=1 // pred_check_branch
      %19 = sbr.rel (0) target = $region17
    $region16: #{tpu_custom_call.1} parent=1 // pred_region
      _
    $region17: #{tpu_custom_call.1} parent=1 // pred_fallthru
      _
    // Predicated region
    $region18: #{tpu_custom_call.1} parent=1 // pred_check
      _
    $region19: #{tpu_custom_call.1} parent=1 // pred_check_branch
      %21 = sbr.rel (0) target = $region21
    $region20: #{tpu_custom_call.1} parent=1 // pred_region
      _
    $region21: #{tpu_custom_call.1} parent=1 // pred_fallthru
      _
    %v22 = vld [vmem:[%s0] sm:$0xf]
    %v23 = vld [vmem:[%s1] sm:$0xff]
    %v24 = vld [vmem:[%s1 + $0x8] sm:$0xff]
    %v25 = vld [vmem:[%s1 + $0x10] sm:$0xff]
    %v26 = vld [vmem:[%s1 + $0x18] sm:$0xff]
    %v27 = vld [vmem:[%s1 + $0x20] sm:$0xff]
    %v28 = vld [vmem:[%s1 + $0x28] sm:$0xff]
    %v29 = vld [vmem:[%s1 + $0x30] sm:$0xff]
    %v30 = vld [vmem:[%s1 + $0x38] sm:$0xff]
    %v31 = vld [vmem:[%s1 + $0x40] sm:$0xff]
    %v32 = vld [vmem:[%s1 + $0x48] sm:$0xff]
    %v33 = vld [vmem:[%s1 + $0x50] sm:$0xff]
    %v34 = vld [vmem:[%s1 + $0x58] sm:$0xff]
    %v35 = vld [vmem:[%s1 + $0x60] sm:$0xff]
    %v36 = vld [vmem:[%s1 + $0x68] sm:$0xff]
    %v37 = vld [vmem:[%s1 + $0x70] sm:$0xff]
    %v38 = vld [vmem:[%s1 + $0x78] sm:$0xff]
    %v39 = vld [vmem:[%s2] sm:$0xff]
    %v40 = vld [vmem:[%s2 + $0x8] sm:$0xff]
    %v41 = vld [vmem:[%s2 + $0x10] sm:$0xff]
    %v42 = vld [vmem:[%s2 + $0x18] sm:$0xff]
    %v43 = vld [vmem:[%s2 + $0x20] sm:$0xff]
    %v44 = vld [vmem:[%s2 + $0x28] sm:$0xff]
    %v45 = vld [vmem:[%s2 + $0x30] sm:$0xff]
    %v46 = vld [vmem:[%s2 + $0x38] sm:$0xff]
    %v47 = vld [vmem:[%s2 + $0x40] sm:$0xff]
    %v48 = vld [vmem:[%s2 + $0x48] sm:$0xff]
    %v49 = vld [vmem:[%s2 + $0x50] sm:$0xff]
    %v50 = vld [vmem:[%s2 + $0x58] sm:$0xff]
    %v51 = vld [vmem:[%s2 + $0x60] sm:$0xff]
    %v52 = vld [vmem:[%s2 + $0x68] sm:$0xff]
    %v53 = vld [vmem:[%s2 + $0x70] sm:$0xff]
    %v54 = vld [vmem:[%s2 + $0x78] sm:$0xff]
    %56 = vset.pattern.permute.xlu0 0
    %57 = vperm.xlu0 %56, %v23
    %v58 = vpop.permute.xlu0 %57
    %61 = vset.pattern.permute.xlu0 0
    %62 = vperm.xlu0 %61, %v24
    %v63 = vpop.permute.xlu0 %62
    %66 = vset.pattern.permute.xlu0 0
    %67 = vperm.xlu0 %66, %v25
    %v68 = vpop.permute.xlu0 %67
    %71 = vset.pattern.permute.xlu0 0
    %72 = vperm.xlu0 %71, %v26
    %v73 = vpop.permute.xlu0 %72
    %76 = vset.pattern.permute.xlu0 0
    %77 = vperm.xlu0 %76, %v27
    %v78 = vpop.permute.xlu0 %77
    %81 = vset.pattern.permute.xlu0 0
    %82 = vperm.xlu0 %81, %v28
    %v83 = vpop.permute.xlu0 %82
    %86 = vset.pattern.permute.xlu0 0
    %87 = vperm.xlu0 %86, %v29
    %v88 = vpop.permute.xlu0 %87
    %91 = vset.pattern.permute.xlu0 0
    %92 = vperm.xlu0 %91, %v30
    %v93 = vpop.permute.xlu0 %92
    %96 = vset.pattern.permute.xlu0 0
    %97 = vperm.xlu0 %96, %v31
    %v98 = vpop.permute.xlu0 %97
    %101 = vset.pattern.permute.xlu0 0
    %102 = vperm.xlu0 %101, %v32
    %v103 = vpop.permute.xlu0 %102
    %106 = vset.pattern.permute.xlu0 0
    %107 = vperm.xlu0 %106, %v33
    %v108 = vpop.permute.xlu0 %107
    %111 = vset.pattern.permute.xlu0 0
    %112 = vperm.xlu0 %111, %v34
    %v113 = vpop.permute.xlu0 %112
    %116 = vset.pattern.permute.xlu0 0
    %117 = vperm.xlu0 %116, %v35
    %v118 = vpop.permute.xlu0 %117
    %121 = vset.pattern.permute.xlu0 0
    %122 = vperm.xlu0 %121, %v36
    %v123 = vpop.permute.xlu0 %122
    %126 = vset.pattern.permute.xlu0 0
    %127 = vperm.xlu0 %126, %v37
    %v128 = vpop.permute.xlu0 %127
    %131 = vset.pattern.permute.xlu0 0
    %132 = vperm.xlu0 %131, %v38
    %v133 = vpop.permute.xlu0 %132
    %v135 = vlaneseq
    %v136 = vshrl.u32 %v135, 7
    %v137 = vsub.s32 0, %v136
    %v138 = vrot.slane %v22, %v137
    %v139 = vmul.f32 %v58, %v138
    %v140 = vmul.f32 %v63, %v138
    %v141 = vmul.f32 %v68, %v138
    %v142 = vmul.f32 %v73, %v138
    %v143 = vmul.f32 %v78, %v138
    %v144 = vmul.f32 %v83, %v138
    %v145 = vmul.f32 %v88, %v138
    %v146 = vmul.f32 %v93, %v138
    %v147 = vmul.f32 %v98, %v138
    %v148 = vmul.f32 %v103, %v138
    %v149 = vmul.f32 %v108, %v138
    %v150 = vmul.f32 %v113, %v138
    %v151 = vmul.f32 %v118, %v138
    %v152 = vmul.f32 %v123, %v138
    %v153 = vmul.f32 %v128, %v138
    %v154 = vmul.f32 %v133, %v138
    %156 = vset.pattern.permute.xlu0 0
    %157 = vperm.xlu0 %156, %v39
    %v158 = vpop.permute.xlu0 %157
    %161 = vset.pattern.permute.xlu0 0
    %162 = vperm.xlu0 %161, %v40
    %v163 = vpop.permute.xlu0 %162
    %166 = vset.pattern.permute.xlu0 0
    %167 = vperm.xlu0 %166, %v41
    %v168 = vpop.permute.xlu0 %167
    %171 = vset.pattern.permute.xlu0 0
    %172 = vperm.xlu0 %171, %v42
    %v173 = vpop.permute.xlu0 %172
    %176 = vset.pattern.permute.xlu0 0
    %177 = vperm.xlu0 %176, %v43
    %v178 = vpop.permute.xlu0 %177
    %181 = vset.pattern.permute.xlu0 0
    %182 = vperm.xlu0 %181, %v44
    %v183 = vpop.permute.xlu0 %182
    %186 = vset.pattern.permute.xlu0 0
    %187 = vperm.xlu0 %186, %v45
    %v188 = vpop.permute.xlu0 %187
    %191 = vset.pattern.permute.xlu0 0
    %192 = vperm.xlu0 %191, %v46
    %v193 = vpop.permute.xlu0 %192
    %196 = vset.pattern.permute.xlu0 0
    %197 = vperm.xlu0 %196, %v47
    %v198 = vpop.permute.xlu0 %197
    %201 = vset.pattern.permute.xlu0 0
    %202 = vperm.xlu0 %201, %v48
    %v203 = vpop.permute.xlu0 %202
    %206 = vset.pattern.permute.xlu0 0
    %207 = vperm.xlu0 %206, %v49
    %v208 = vpop.permute.xlu0 %207
    %211 = vset.pattern.permute.xlu0 0
    %212 = vperm.xlu0 %211, %v50
    %v213 = vpop.permute.xlu0 %212
    %216 = vset.pattern.permute.xlu0 0
    %217 = vperm.xlu0 %216, %v51
    %v218 = vpop.permute.xlu0 %217
    %221 = vset.pattern.permute.xlu0 0
    %222 = vperm.xlu0 %221, %v52
    %v223 = vpop.permute.xlu0 %222
    %226 = vset.pattern.permute.xlu0 0
    %227 = vperm.xlu0 %226, %v53
    %v228 = vpop.permute.xlu0 %227
    %231 = vset.pattern.permute.xlu0 0
    %232 = vperm.xlu0 %231, %v54
    %v233 = vpop.permute.xlu0 %232
    %v235 = vadd.f32 %v158, %v139
    %v236 = vadd.f32 %v163, %v140
    %v237 = vadd.f32 %v168, %v141
    %v238 = vadd.f32 %v173, %v142
    %v239 = vadd.f32 %v178, %v143
    %v240 = vadd.f32 %v183, %v144
    %v241 = vadd.f32 %v188, %v145
    %v242 = vadd.f32 %v193, %v146
    %v243 = vadd.f32 %v198, %v147
    %v244 = vadd.f32 %v203, %v148
    %v245 = vadd.f32 %v208, %v149
    %v246 = vadd.f32 %v213, %v150
    %v247 = vadd.f32 %v218, %v151
    %v248 = vadd.f32 %v223, %v152
    %v249 = vadd.f32 %v228, %v153
    %v250 = vadd.f32 %v233, %v154
    %251 = vset.pattern.permute.xlu0 1
    %252 = vperm.xlu0 %251, %v23
    %v253 = vpop.permute.xlu0 %252
    %255 = vset.pattern.permute.xlu0 1
    %256 = vperm.xlu0 %255, %v24
    %v257 = vpop.permute.xlu0 %256
    %259 = vset.pattern.permute.xlu0 1
    %260 = vperm.xlu0 %259, %v25
    %v261 = vpop.permute.xlu0 %260
    %263 = vset.pattern.permute.xlu0 1
    %264 = vperm.xlu0 %263, %v26
    %v265 = vpop.permute.xlu0 %264
    %267 = vset.pattern.permute.xlu0 1
    %268 = vperm.xlu0 %267, %v27
    %v269 = vpop.permute.xlu0 %268
    %271 = vset.pattern.permute.xlu0 1
    %272 = vperm.xlu0 %271, %v28
    %v273 = vpop.permute.xlu0 %272
    %275 = vset.pattern.permute.xlu0 1
    %276 = vperm.xlu0 %275, %v29
    %v277 = vpop.permute.xlu0 %276
    %279 = vset.pattern.permute.xlu0 1
    %280 = vperm.xlu0 %279, %v30
    %v281 = vpop.permute.xlu0 %280
    %283 = vset.pattern.permute.xlu0 1
    %284 = vperm.xlu0 %283, %v31
    %v285 = vpop.permute.xlu0 %284
    %287 = vset.pattern.permute.xlu0 1
    %288 = vperm.xlu0 %287, %v32
    %v289 = vpop.permute.xlu0 %288
    %291 = vset.pattern.permute.xlu0 1
    %292 = vperm.xlu0 %291, %v33
    %v293 = vpop.permute.xlu0 %292
    %295 = vset.pattern.permute.xlu0 1
    %296 = vperm.xlu0 %295, %v34
    %v297 = vpop.permute.xlu0 %296
    %299 = vset.pattern.permute.xlu0 1
    %300 = vperm.xlu0 %299, %v35
    %v301 = vpop.permute.xlu0 %300
    %303 = vset.pattern.permute.xlu0 1
    %304 = vperm.xlu0 %303, %v36
    %v305 = vpop.permute.xlu0 %304
    %307 = vset.pattern.permute.xlu0 1
    %308 = vperm.xlu0 %307, %v37
    %v309 = vpop.permute.xlu0 %308
    %311 = vset.pattern.permute.xlu0 1
    %312 = vperm.xlu0 %311, %v38
    %v313 = vpop.permute.xlu0 %312
    %v315 = vlaneseq
    %v316 = vshrl.u32 %v315, 7
    %v317 = vsub.s32 1, %v316
    %v318 = vrot.slane %v22, %v317
    %v319 = vmul.f32 %v253, %v318
    %v320 = vmul.f32 %v257, %v318
    %v321 = vmul.f32 %v261, %v318
    %v322 = vmul.f32 %v265, %v318
    %v323 = vmul.f32 %v269, %v318
    %v324 = vmul.f32 %v273, %v318
    %v325 = vmul.f32 %v277, %v318
    %v326 = vmul.f32 %v281, %v318
    %v327 = vmul.f32 %v285, %v318
    %v328 = vmul.f32 %v289, %v318
    %v329 = vmul.f32 %v293, %v318
    %v330 = vmul.f32 %v297, %v318
    %v331 = vmul.f32 %v301, %v318
    %v332 = vmul.f32 %v305, %v318
    %v333 = vmul.f32 %v309, %v318
    %v334 = vmul.f32 %v313, %v318
    %v335 = vadd.f32 %v235, %v319
    %v336 = vadd.f32 %v236, %v320
    %v337 = vadd.f32 %v237, %v321
    %v338 = vadd.f32 %v238, %v322
    %v339 = vadd.f32 %v239, %v323
    %v340 = vadd.f32 %v240, %v324
    %v341 = vadd.f32 %v241, %v325
    %v342 = vadd.f32 %v242, %v326
    %v343 = vadd.f32 %v243, %v327
    %v344 = vadd.f32 %v244, %v328
    %v345 = vadd.f32 %v245, %v329
    %v346 = vadd.f32 %v246, %v330
    %v347 = vadd.f32 %v247, %v331
    %v348 = vadd.f32 %v248, %v332
    %v349 = vadd.f32 %v249, %v333
    %v350 = vadd.f32 %v250, %v334
    %351 = vset.pattern.permute.xlu0 2
    %352 = vperm.xlu0 %351, %v23
    %v353 = vpop.permute.xlu0 %352
    %355 = vset.pattern.permute.xlu0 2
    %356 = vperm.xlu0 %355, %v24
    %v357 = vpop.permute.xlu0 %356
    %359 = vset.pattern.permute.xlu0 2
    %360 = vperm.xlu0 %359, %v25
    %v361 = vpop.permute.xlu0 %360
    %363 = vset.pattern.permute.xlu0 2
    %364 = vperm.xlu0 %363, %v26
    %v365 = vpop.permute.xlu0 %364
    %367 = vset.pattern.permute.xlu0 2
    %368 = vperm.xlu0 %367, %v27
    %v369 = vpop.permute.xlu0 %368
    %371 = vset.pattern.permute.xlu0 2
    %372 = vperm.xlu0 %371, %v28
    %v373 = vpop.permute.xlu0 %372
    %375 = vset.pattern.permute.xlu0 2
    %376 = vperm.xlu0 %375, %v29
    %v377 = vpop.permute.xlu0 %376
    %379 = vset.pattern.permute.xlu0 2
    %380 = vperm.xlu0 %379, %v30
    %v381 = vpop.permute.xlu0 %380
    %383 = vset.pattern.permute.xlu0 2
    %384 = vperm.xlu0 %383, %v31
    %v385 = vpop.permute.xlu0 %384
    %387 = vset.pattern.permute.xlu0 2
    %388 = vperm.xlu0 %387, %v32
    %v389 = vpop.permute.xlu0 %388
    %391 = vset.pattern.permute.xlu0 2
    %392 = vperm.xlu0 %391, %v33
    %v393 = vpop.permute.xlu0 %392
    %395 = vset.pattern.permute.xlu0 2
    %396 = vperm.xlu0 %395, %v34
    %v397 = vpop.permute.xlu0 %396
    %399 = vset.pattern.permute.xlu0 2
    %400 = vperm.xlu0 %399, %v35
    %v401 = vpop.permute.xlu0 %400
    %403 = vset.pattern.permute.xlu0 2
    %404 = vperm.xlu0 %403, %v36
    %v405 = vpop.permute.xlu0 %404
    %407 = vset.pattern.permute.xlu0 2
    %408 = vperm.xlu0 %407, %v37
    %v409 = vpop.permute.xlu0 %408
    %411 = vset.pattern.permute.xlu0 2
    %412 = vperm.xlu0 %411, %v38
    %v413 = vpop.permute.xlu0 %412
    %v415 = vlaneseq
    %v416 = vshrl.u32 %v415, 7
    %v417 = vsub.s32 2, %v416
    %v418 = vrot.slane %v22, %v417
    %v419 = vmul.f32 %v353, %v418
    %v420 = vmul.f32 %v357, %v418
    %v421 = vmul.f32 %v361, %v418
    %v422 = vmul.f32 %v365, %v418
    %v423 = vmul.f32 %v369, %v418
    %v424 = vmul.f32 %v373, %v418
    %v425 = vmul.f32 %v377, %v418
    %v426 = vmul.f32 %v381, %v418
    %v427 = vmul.f32 %v385, %v418
    %v428 = vmul.f32 %v389, %v418
    %v429 = vmul.f32 %v393, %v418
    %v430 = vmul.f32 %v397, %v418
    %v431 = vmul.f32 %v401, %v418
    %v432 = vmul.f32 %v405, %v418
    %v433 = vmul.f32 %v409, %v418
    %v434 = vmul.f32 %v413, %v418
    %v435 = vadd.f32 %v335, %v419
    %v436 = vadd.f32 %v336, %v420
    %v437 = vadd.f32 %v337, %v421
    %v438 = vadd.f32 %v338, %v422
    %v439 = vadd.f32 %v339, %v423
    %v440 = vadd.f32 %v340, %v424
    %v441 = vadd.f32 %v341, %v425
    %v442 = vadd.f32 %v342, %v426
    %v443 = vadd.f32 %v343, %v427
    %v444 = vadd.f32 %v344, %v428
    %v445 = vadd.f32 %v345, %v429
    %v446 = vadd.f32 %v346, %v430
    %v447 = vadd.f32 %v347, %v431
    %v448 = vadd.f32 %v348, %v432
    %v449 = vadd.f32 %v349, %v433
    %v450 = vadd.f32 %v350, %v434
    %451 = vset.pattern.permute.xlu0 3
    %452 = vperm.xlu0 %451, %v23
    %v453 = vpop.permute.xlu0 %452
    %455 = vset.pattern.permute.xlu0 3
    %456 = vperm.xlu0 %455, %v24
    %v457 = vpop.permute.xlu0 %456
    %459 = vset.pattern.permute.xlu0 3
    %460 = vperm.xlu0 %459, %v25
    %v461 = vpop.permute.xlu0 %460
    %463 = vset.pattern.permute.xlu0 3
    %464 = vperm.xlu0 %463, %v26
    %v465 = vpop.permute.xlu0 %464
    %467 = vset.pattern.permute.xlu0 3
    %468 = vperm.xlu0 %467, %v27
    %v469 = vpop.permute.xlu0 %468
    %471 = vset.pattern.permute.xlu0 3
    %472 = vperm.xlu0 %471, %v28
    %v473 = vpop.permute.xlu0 %472
    %475 = vset.pattern.permute.xlu0 3
    %476 = vperm.xlu0 %475, %v29
    %v477 = vpop.permute.xlu0 %476
    %479 = vset.pattern.permute.xlu0 3
    %480 = vperm.xlu0 %479, %v30
    %v481 = vpop.permute.xlu0 %480
    %483 = vset.pattern.permute.xlu0 3
    %484 = vperm.xlu0 %483, %v31
    %v485 = vpop.permute.xlu0 %484
    %487 = vset.pattern.permute.xlu0 3
    %488 = vperm.xlu0 %487, %v32
    %v489 = vpop.permute.xlu0 %488
    %491 = vset.pattern.permute.xlu0 3
    %492 = vperm.xlu0 %491, %v33
    %v493 = vpop.permute.xlu0 %492
    %495 = vset.pattern.permute.xlu0 3
    %496 = vperm.xlu0 %495, %v34
    %v497 = vpop.permute.xlu0 %496
    %499 = vset.pattern.permute.xlu0 3
    %500 = vperm.xlu0 %499, %v35
    %v501 = vpop.permute.xlu0 %500
    %503 = vset.pattern.permute.xlu0 3
    %504 = vperm.xlu0 %503, %v36
    %v505 = vpop.permute.xlu0 %504
    %507 = vset.pattern.permute.xlu0 3
    %508 = vperm.xlu0 %507, %v37
    %v509 = vpop.permute.xlu0 %508
    %511 = vset.pattern.permute.xlu0 3
    %512 = vperm.xlu0 %511, %v38
    %v513 = vpop.permute.xlu0 %512
    %v515 = vlaneseq
    %v516 = vshrl.u32 %v515, 7
    %v517 = vsub.s32 3, %v516
    %v518 = vrot.slane %v22, %v517
    %v519 = vmul.f32 %v453, %v518
    %v520 = vmul.f32 %v457, %v518
    %v521 = vmul.f32 %v461, %v518
    %v522 = vmul.f32 %v465, %v518
    %v523 = vmul.f32 %v469, %v518
    %v524 = vmul.f32 %v473, %v518
    %v525 = vmul.f32 %v477, %v518
    %v526 = vmul.f32 %v481, %v518
    %v527 = vmul.f32 %v485, %v518
    %v528 = vmul.f32 %v489, %v518
    %v529 = vmul.f32 %v493, %v518
    %v530 = vmul.f32 %v497, %v518
    %v531 = vmul.f32 %v501, %v518
    %v532 = vmul.f32 %v505, %v518
    %v533 = vmul.f32 %v509, %v518
    %v534 = vmul.f32 %v513, %v518
    %v535 = vadd.f32 %v435, %v519
    %v536 = vadd.f32 %v436, %v520
    %v537 = vadd.f32 %v437, %v521
    %v538 = vadd.f32 %v438, %v522
    %v539 = vadd.f32 %v439, %v523
    %v540 = vadd.f32 %v440, %v524
    %v541 = vadd.f32 %v441, %v525
    %v542 = vadd.f32 %v442, %v526
    %v543 = vadd.f32 %v443, %v527
    %v544 = vadd.f32 %v444, %v528
    %v545 = vadd.f32 %v445, %v529
    %v546 = vadd.f32 %v446, %v530
    %v547 = vadd.f32 %v447, %v531
    %v548 = vadd.f32 %v448, %v532
    %v549 = vadd.f32 %v449, %v533
    %v550 = vadd.f32 %v450, %v534
    %v551 = vmax.f32 %v535, 0.0
    %v552 = vmax.f32 %v536, 0.0
    %v553 = vmax.f32 %v537, 0.0
    %v554 = vmax.f32 %v538, 0.0
    %v555 = vmax.f32 %v539, 0.0
    %v556 = vmax.f32 %v540, 0.0
    %v557 = vmax.f32 %v541, 0.0
    %v558 = vmax.f32 %v542, 0.0
    %v559 = vmax.f32 %v543, 0.0
    %v560 = vmax.f32 %v544, 0.0
    %v561 = vmax.f32 %v545, 0.0
    %v562 = vmax.f32 %v546, 0.0
    %v563 = vmax.f32 %v547, 0.0
    %v564 = vmax.f32 %v548, 0.0
    %v565 = vmax.f32 %v549, 0.0
    %v566 = vmax.f32 %v550, 0.0
    %v567 = vld [vmem:[%s3] sm:$0xff]
    %v568 = vld [vmem:[%s3 + $0x8] sm:$0xff]
    %v569 = vld [vmem:[%s3 + $0x10] sm:$0xff]
    %v570 = vld [vmem:[%s3 + $0x18] sm:$0xff]
    %v571 = vld [vmem:[%s3 + $0x20] sm:$0xff]
    %v572 = vld [vmem:[%s3 + $0x28] sm:$0xff]
    %v573 = vld [vmem:[%s3 + $0x30] sm:$0xff]
    %v574 = vld [vmem:[%s3 + $0x38] sm:$0xff]
    %v575 = vld [vmem:[%s3 + $0x40] sm:$0xff]
    %v576 = vld [vmem:[%s3 + $0x48] sm:$0xff]
    %v577 = vld [vmem:[%s3 + $0x50] sm:$0xff]
    %v578 = vld [vmem:[%s3 + $0x58] sm:$0xff]
    %v579 = vld [vmem:[%s3 + $0x60] sm:$0xff]
    %v580 = vld [vmem:[%s3 + $0x68] sm:$0xff]
    %v581 = vld [vmem:[%s3 + $0x70] sm:$0xff]
    %v582 = vld [vmem:[%s3 + $0x78] sm:$0xff]
    %584 = vset.pattern.permute.xlu0 0
    %585 = vperm.xlu0 %584, %v567
    %v586 = vpop.permute.xlu0 %585
    %589 = vset.pattern.permute.xlu0 0
    %590 = vperm.xlu0 %589, %v568
    %v591 = vpop.permute.xlu0 %590
    %594 = vset.pattern.permute.xlu0 0
    %595 = vperm.xlu0 %594, %v569
    %v596 = vpop.permute.xlu0 %595
    %599 = vset.pattern.permute.xlu0 0
    %600 = vperm.xlu0 %599, %v570
    %v601 = vpop.permute.xlu0 %600
    %604 = vset.pattern.permute.xlu0 0
    %605 = vperm.xlu0 %604, %v571
    %v606 = vpop.permute.xlu0 %605
    %609 = vset.pattern.permute.xlu0 0
    %610 = vperm.xlu0 %609, %v572
    %v611 = vpop.permute.xlu0 %610
    %614 = vset.pattern.permute.xlu0 0
    %615 = vperm.xlu0 %614, %v573
    %v616 = vpop.permute.xlu0 %615
    %619 = vset.pattern.permute.xlu0 0
    %620 = vperm.xlu0 %619, %v574
    %v621 = vpop.permute.xlu0 %620
    %624 = vset.pattern.permute.xlu0 0
    %625 = vperm.xlu0 %624, %v575
    %v626 = vpop.permute.xlu0 %625
    %629 = vset.pattern.permute.xlu0 0
    %630 = vperm.xlu0 %629, %v576
    %v631 = vpop.permute.xlu0 %630
    %634 = vset.pattern.permute.xlu0 0
    %635 = vperm.xlu0 %634, %v577
    %v636 = vpop.permute.xlu0 %635
    %639 = vset.pattern.permute.xlu0 0
    %640 = vperm.xlu0 %639, %v578
    %v641 = vpop.permute.xlu0 %640
    %644 = vset.pattern.permute.xlu0 0
    %645 = vperm.xlu0 %644, %v579
    %v646 = vpop.permute.xlu0 %645
    %649 = vset.pattern.permute.xlu0 0
    %650 = vperm.xlu0 %649, %v580
    %v651 = vpop.permute.xlu0 %650
    %654 = vset.pattern.permute.xlu0 0
    %655 = vperm.xlu0 %654, %v581
    %v656 = vpop.permute.xlu0 %655
    %659 = vset.pattern.permute.xlu0 0
    %660 = vperm.xlu0 %659, %v582
    %v661 = vpop.permute.xlu0 %660
    %v663 = vmul.f32 %v551, %v586
    %v664 = vmul.f32 %v552, %v591
    %v665 = vmul.f32 %v553, %v596
    %v666 = vmul.f32 %v554, %v601
    %v667 = vmul.f32 %v555, %v606
    %v668 = vmul.f32 %v556, %v611
    %v669 = vmul.f32 %v557, %v616
    %v670 = vmul.f32 %v558, %v621
    %v671 = vmul.f32 %v559, %v626
    %v672 = vmul.f32 %v560, %v631
    %v673 = vmul.f32 %v561, %v636
    %v674 = vmul.f32 %v562, %v641
    %v675 = vmul.f32 %v563, %v646
    %v676 = vmul.f32 %v564, %v651
    %v677 = vmul.f32 %v565, %v656
    %v678 = vmul.f32 %v566, %v661
    %v679 = vadd.f32 %v663, %v664
    %v680 = vadd.f32 %v679, %v665
    %v681 = vadd.f32 %v680, %v666
    %v682 = vadd.f32 %v681, %v667
    %v683 = vadd.f32 %v682, %v668
    %v684 = vadd.f32 %v683, %v669
    %v685 = vadd.f32 %v684, %v670
    %v686 = vadd.f32 %v685, %v671
    %v687 = vadd.f32 %v686, %v672
    %v688 = vadd.f32 %v687, %v673
    %v689 = vadd.f32 %v688, %v674
    %v690 = vadd.f32 %v689, %v675
    %v691 = vadd.f32 %v690, %v676
    %v692 = vadd.f32 %v691, %v677
    %v693 = vadd.f32 %v692, %v678
    %v694 = vrot.slane %v693, 4
    %v695 = vadd.f32 %v693, %v694
    %v696 = vrot.slane %v695, 2
    %v697 = vadd.f32 %v695, %v696
    %v698 = vrot.slane %v697, 1
    %v699 = vadd.f32 %v697, %v698
    %s700 = sld [smem:[#allocation2]]
    %v701 = vstv %s700
    %v702 = vadd.f32 %v699, %v701
    %703 = vst [vmem:[#allocation3] sm:$0x1] %v702
    // Predicated region
    $region22: #{tpu_custom_call.1} parent=1 // pred_check
      _
    $region23: #{tpu_custom_call.1} parent=1 // pred_check_branch
      %705 = sbr.rel (0) target = $region25
    $region24: #{tpu_custom_call.1} parent=1 // pred_region
      %s707 = ssub.s32 16, 16
      %708 = vsyncadd [#allocation4], %s707
      %s710 = sshll.u32 [#allocation3], 4
      %s711 = int_to_ptr.vmem [resolvable:$true] %s710
      %713 = dma.vmem_to_hbm [thread:$0]  %s711, 16, %s5, [#allocation4]
    $region25: #{tpu_custom_call.1} parent=1 // pred_fallthru
      _
    // Predicated region
    $region26: #{tpu_custom_call.1} parent=1 // pred_check
      _
    $region27: #{tpu_custom_call.1} parent=1 // pred_check_branch
      %715 = sbr.rel (0) target = $region29
    $region28: #{tpu_custom_call.1} parent=1 // pred_region
      %716 = dma.done [#allocation4], 16
    $region29: #{tpu_custom_call.1} parent=1 // pred_fallthru
      _
    %717 = vsyncpa [#allocation4], 1

</llo_original>
